<compile_context>
chip_gen: v7x
topology: tpu7x:2x2x1
jax: 0.10.0
libtpu: 0.0.40
codegen_flags: <defaults>
</compile_context>

<pallas_src>
import jax
import jax.numpy as jnp
from jax.experimental import pallas as pl
from jax.experimental.pallas import tpu as pltpu


def _make_kernel(C, L, k1, dil, k2, pad1, pad2, max_pad):
    def kernel(x_ref, w1_ref, w2_ref, shift_ref, o_ref, pbuf_ref):
        # Zero only the pad columns (cheap; interior is overwritten each step).
        # Done every step so correctness does not depend on grid->core mapping.
        if max_pad > 0:
            pbuf_ref[:, :max_pad] = jnp.zeros((C, max_pad), jnp.bfloat16)
            pbuf_ref[:, max_pad + L:2 * max_pad + L] = jnp.zeros(
                (C, max_pad), jnp.bfloat16)

        x = x_ref[0]  # (C, L) f32 -- kept f32 for the exact residual add.

        # ---- conv1 (BN1 scale folded into weights), k1 taps, dilation=dil ----
        pbuf_ref[:, max_pad:max_pad + L] = x.astype(jnp.bfloat16)
        base1 = max_pad - pad1
        h = jnp.dot(w1_ref[0], pbuf_ref[:, base1:base1 + L],
                    preferred_element_type=jnp.float32)
        for k in range(1, k1):
            off = base1 + k * dil
            h = h + jnp.dot(w1_ref[k], pbuf_ref[:, off:off + L],
                            preferred_element_type=jnp.float32)

        # ---- BN1 shift + SiLU ----
        h = h + shift_ref[0]
        h = h * jax.nn.sigmoid(h)

        # ---- conv2 (BN2 scale folded into weights), k2 taps, dilation=1 ----
        pbuf_ref[:, max_pad:max_pad + L] = h.astype(jnp.bfloat16)
        base2 = max_pad - pad2
        y = jnp.dot(w2_ref[0], pbuf_ref[:, base2:base2 + L],
                    preferred_element_type=jnp.float32)
        for k in range(1, k2):
            off = base2 + k
            y = y + jnp.dot(w2_ref[k], pbuf_ref[:, off:off + L],
                            preferred_element_type=jnp.float32)

        # ---- BN2 shift + residual add ----
        y = y + shift_ref[1]
        o_ref[0] = x + y

    return kernel


def residual_block_1d(x_ncl, w1, w2, bn1, bn2, *, dilation=1, eps=1e-5):
    """x_ncl: (N, C, L) float32.
    w1: (C, C, k1), w2: (C, C, 3) -- PyTorch Conv1d weight layout (O, I, K).
    bn1/bn2: dicts with 'gamma', 'beta', 'mean', 'var', each shape (C,)."""
    N, C, L = x_ncl.shape
    k1 = w1.shape[-1]
    k2 = w2.shape[-1]
    assert k1 % 2 == 1 and k2 % 2 == 1, "even kernel sizes are not supported"

    pad1 = (k1 - 1) // 2 * dilation
    pad2 = (k2 - 1) // 2
    max_pad = max(pad1, pad2)

    def fold(bn):
        scale = bn["gamma"] / jnp.sqrt(bn["var"] + eps)
        shift = bn["beta"] - bn["mean"] * scale
        return scale.astype(jnp.float32), shift.astype(jnp.float32)

    s1, b1 = fold(bn1)
    s2, b2 = fold(bn2)

    # Fold BN scales into conv weights (inference mode), arrange as
    # (K, C_out, C_in) so each tap is w[k] @ x_shifted, cast to bf16 for MXU.
    w1_t = jnp.transpose(w1.astype(jnp.float32) * s1[:, None, None],
                         (2, 0, 1)).astype(jnp.bfloat16)
    w2_t = jnp.transpose(w2.astype(jnp.float32) * s2[:, None, None],
                         (2, 0, 1)).astype(jnp.bfloat16)

    # Pack the two BN shifts into one array: (2, C, 1), broadcast over L.
    shifts = jnp.stack([b1, b2]).reshape(2, C, 1).astype(jnp.float32)

    x_f32 = x_ncl.astype(jnp.float32)

    kernel = _make_kernel(C, L, k1, dilation, k2, pad1, pad2, max_pad)

    out = pl.pallas_call(
        kernel,
        out_shape=jax.ShapeDtypeStruct((N, C, L), jnp.float32),
        grid_spec=pltpu.PrefetchScalarGridSpec(
            num_scalar_prefetch=0,
            grid=(N,),
            in_specs=[
                pl.BlockSpec((1, C, L), lambda n: (n, 0, 0)),    # x (per batch)
                pl.BlockSpec((k1, C, C), lambda n: (0, 0, 0)),   # conv1 taps
                pl.BlockSpec((k2, C, C), lambda n: (0, 0, 0)),   # conv2 taps
                pl.BlockSpec((2, C, 1), lambda n: (0, 0, 0)),    # bn shifts
            ],
            out_specs=pl.BlockSpec((1, C, L), lambda n: (n, 0, 0)),
            scratch_shapes=[
                # Single padded scratch shared by both convs (bf16).
                pltpu.VMEM((C, L + 2 * max_pad), jnp.bfloat16),
            ],
        ),
        compiler_params=pltpu.CompilerParams(
            dimension_semantics=("parallel",)),
    )(x_f32, w1_t, w2_t, shifts)

    return out


def reference(x_ncl, w1, w2, bn1, bn2, *, dilation=1, eps=1e-5):
    """Pure-JAX reference matching the PyTorch forward (BN in eval mode)."""
    def conv(x, w, dil, pad):
        return jax.lax.conv_general_dilated(
            x, w, window_strides=(1,), padding=[(pad, pad)],
            rhs_dilation=(dil,), dimension_numbers=("NCH", "OIH", "NCH"),
            precision=jax.lax.Precision.HIGHEST)

    def bn(x, p):
        scale = p["gamma"] / jnp.sqrt(p["var"] + eps)
        shift = p["beta"] - p["mean"] * scale
        return x * scale[None, :, None] + shift[None, :, None]

    k1 = w1.shape[-1]
    h = conv(x_ncl, w1, dilation, (k1 - 1) // 2 * dilation)
    h = bn(h, bn1)
    h = h * jax.nn.sigmoid(h)
    y = conv(h, w2, 1, 1)
    y = bn(y, bn2)
    return x_ncl + y


if __name__ == "__main__":
    key = jax.random.PRNGKey(0)
    N, C, L = 2, 16, 64
    kernel_size, dilation = 3, 1

    ks = jax.random.split(key, 11)
    x = jax.random.normal(ks[0], (N, C, L), jnp.float32)
    w1 = jax.random.normal(ks[1], (C, C, kernel_size), jnp.float32) * 0.1
    w2 = jax.random.normal(ks[2], (C, C, 3), jnp.float32) * 0.1
    bn1 = dict(
        gamma=jax.random.uniform(ks[3], (C,), minval=0.5, maxval=1.5),
        beta=jax.random.normal(ks[4], (C,)) * 0.1,
        mean=jax.random.normal(ks[5], (C,)) * 0.1,
        var=jax.random.uniform(ks[6], (C,), minval=0.5, maxval=1.5),
    )
    bn2 = dict(
        gamma=jax.random.uniform(ks[7], (C,), minval=0.5, maxval=1.5),
        beta=jax.random.normal(ks[8], (C,)) * 0.1,
        mean=jax.random.normal(ks[9], (C,)) * 0.1,
        var=jax.random.uniform(ks[10], (C,), minval=0.5, maxval=1.5),
    )

    out = residual_block_1d(x, w1, w2, bn1, bn2, dilation=dilation)
    out = jax.block_until_ready(out)

    ref = reference(x, w1, w2, bn1, bn2, dilation=dilation)
    assert out.shape == (N, C, L)
    # bf16 MXU operands vs f32 HIGHEST reference -> ~1e-2-level agreement.
    assert jnp.allclose(out, ref, rtol=2e-2, atol=2e-2), "mismatch vs reference"

    print("KERNEL_OK")
</pallas_src>

<mosaic_0001>
module attributes {stable_mosaic.version = 11 : i64} {
  func.func @kernel(%arg0: i32, %arg1: memref<1x16x64xf32, #tpu.memory_space<vmem>>, %arg2: memref<3x16x16xbf16, #tpu.memory_space<vmem>>, %arg3: memref<3x16x16xbf16, #tpu.memory_space<vmem>>, %arg4: memref<2x16x1xf32, #tpu.memory_space<vmem>>, %arg5: memref<1x16x64xf32, #tpu.memory_space<vmem>>, %arg6: memref<16x66xbf16, #tpu.memory_space<vmem>>) attributes {dimension_semantics = [#tpu.dimension_semantics<parallel>], iteration_bounds = array<i64: 2>, scalar_prefetch = 0 : i64, scratch_operands = 1 : i64, tpu.core_type = #tpu.core_type<tc>, window_params = [{transform_indices = @transform_0, window_bounds = array<i64: 1, 16, 64>}, {pipeline_mode = #tpu.pipeline_mode<synchronous>, transform_indices = @transform_1, window_bounds = array<i64: 3, 16, 16>}, {pipeline_mode = #tpu.pipeline_mode<synchronous>, transform_indices = @transform_2, window_bounds = array<i64: 3, 16, 16>}, {pipeline_mode = #tpu.pipeline_mode<synchronous>, transform_indices = @transform_3, window_bounds = array<i64: 2, 16, 1>}, {transform_indices = @transform_4, window_bounds = array<i64: 1, 16, 64>}]} {
    %cst = arith.constant 0.000000e+00 : bf16
    %0 = vector.broadcast %cst : bf16 to vector<16x1xbf16>
    %c0 = arith.constant 0 : index
    %c0_0 = arith.constant 0 : index
    %1 = vector.load %arg6[%c0, %c0_0] : memref<16x66xbf16, #tpu.memory_space<vmem>>, vector<16x1xbf16>
    tpu.vector_store %arg6[%c0, %c0_0], %0 {strides = array<i32>} : memref<16x66xbf16, #tpu.memory_space<vmem>>, vector<16x1xbf16>,
    %cst_1 = arith.constant 0.000000e+00 : bf16
    %2 = vector.broadcast %cst_1 : bf16 to vector<16x1xbf16>
    %c0_2 = arith.constant 0 : index
    %c65 = arith.constant 65 : index
    %3 = vector.load %arg6[%c0_2, %c65] : memref<16x66xbf16, #tpu.memory_space<vmem>>, vector<16x1xbf16>
    tpu.vector_store %arg6[%c0_2, %c65], %2 {strides = array<i32>} : memref<16x66xbf16, #tpu.memory_space<vmem>>, vector<16x1xbf16>,
    %c0_3 = arith.constant 0 : index
    %c0_4 = arith.constant 0 : index
    %c0_5 = arith.constant 0 : index
    %4 = vector.load %arg1[%c0_3, %c0_4, %c0_5] : memref<1x16x64xf32, #tpu.memory_space<vmem>>, vector<1x16x64xf32>
    %5 = vector.shape_cast %4 : vector<1x16x64xf32> to vector<16x64xf32>
    %6 = arith.truncf %5 : vector<16x64xf32> to vector<16x64xbf16>
    %c0_6 = arith.constant 0 : index
    %c1 = arith.constant 1 : index
    %7 = vector.load %arg6[%c0_6, %c1] : memref<16x66xbf16, #tpu.memory_space<vmem>>, vector<16x64xbf16>
    tpu.vector_store %arg6[%c0_6, %c1], %6 {strides = array<i32>} : memref<16x66xbf16, #tpu.memory_space<vmem>>, vector<16x64xbf16>,
    %c0_7 = arith.constant 0 : index
    %c0_8 = arith.constant 0 : index
    %c0_9 = arith.constant 0 : index
    %8 = vector.load %arg2[%c0_7, %c0_8, %c0_9] : memref<3x16x16xbf16, #tpu.memory_space<vmem>>, vector<1x16x16xbf16>
    %9 = vector.shape_cast %8 : vector<1x16x16xbf16> to vector<16x16xbf16>
    %c0_10 = arith.constant 0 : index
    %c0_11 = arith.constant 0 : index
    %10 = vector.load %arg6[%c0_10, %c0_11] : memref<16x66xbf16, #tpu.memory_space<vmem>>, vector<16x64xbf16>
    %cst_12 = arith.constant dense<0.000000e+00> : vector<16x64xf32>
    %11 = tpu.matmul %9, %10, %cst_12 {dimension_numbers = #tpu.dot_dimension_numbers<[1], [0], [0], [1], [0, 0, 1, 1], [], []>} : vector<16x16xbf16>, vector<16x64xbf16>, vector<16x64xf32> -> vector<16x64xf32>
    %c1_13 = arith.constant 1 : index
    %c0_14 = arith.constant 0 : index
    %c0_15 = arith.constant 0 : index
    %12 = vector.load %arg2[%c1_13, %c0_14, %c0_15] : memref<3x16x16xbf16, #tpu.memory_space<vmem>>, vector<1x16x16xbf16>
    %13 = vector.shape_cast %12 : vector<1x16x16xbf16> to vector<16x16xbf16>
    %c0_16 = arith.constant 0 : index
    %c1_17 = arith.constant 1 : index
    %14 = vector.load %arg6[%c0_16, %c1_17] : memref<16x66xbf16, #tpu.memory_space<vmem>>, vector<16x64xbf16>
    %cst_18 = arith.constant dense<0.000000e+00> : vector<16x64xf32>
    %15 = tpu.matmul %13, %14, %cst_18 {dimension_numbers = #tpu.dot_dimension_numbers<[1], [0], [0], [1], [0, 0, 1, 1], [], []>} : vector<16x16xbf16>, vector<16x64xbf16>, vector<16x64xf32> -> vector<16x64xf32>
    %16 = arith.addf %11, %15 : vector<16x64xf32>
    %c2 = arith.constant 2 : index
    %c0_19 = arith.constant 0 : index
    %c0_20 = arith.constant 0 : index
    %17 = vector.load %arg2[%c2, %c0_19, %c0_20] : memref<3x16x16xbf16, #tpu.memory_space<vmem>>, vector<1x16x16xbf16>
    %18 = vector.shape_cast %17 : vector<1x16x16xbf16> to vector<16x16xbf16>
    %c0_21 = arith.constant 0 : index
    %c2_22 = arith.constant 2 : index
    %19 = vector.load %arg6[%c0_21, %c2_22] : memref<16x66xbf16, #tpu.memory_space<vmem>>, vector<16x64xbf16>
    %cst_23 = arith.constant dense<0.000000e+00> : vector<16x64xf32>
    %20 = tpu.matmul %18, %19, %cst_23 {dimension_numbers = #tpu.dot_dimension_numbers<[1], [0], [0], [1], [0, 0, 1, 1], [], []>} : vector<16x16xbf16>, vector<16x64xbf16>, vector<16x64xf32> -> vector<16x64xf32>
    %21 = arith.addf %16, %20 : vector<16x64xf32>
    %c0_24 = arith.constant 0 : index
    %c0_25 = arith.constant 0 : index
    %c0_26 = arith.constant 0 : index
    %22 = vector.load %arg4[%c0_24, %c0_25, %c0_26] : memref<2x16x1xf32, #tpu.memory_space<vmem>>, vector<1x16x1xf32>
    %23 = vector.shape_cast %22 : vector<1x16x1xf32> to vector<16x1xf32>
    %24 = vector.broadcast %23 : vector<16x1xf32> to vector<16x64xf32>
    %25 = arith.addf %21, %24 : vector<16x64xf32>
    %26 = arith.negf %25 : vector<16x64xf32>
    %27 = math.exp %26 : vector<16x64xf32>
    %cst_27 = arith.constant 1.000000e+00 : f32
    %28 = vector.broadcast %cst_27 : f32 to vector<16x64xf32>
    %29 = arith.addf %28, %27 : vector<16x64xf32>
    %30 = arith.divf %28, %29 : vector<16x64xf32>
    %31 = arith.mulf %25, %30 : vector<16x64xf32>
    %32 = arith.truncf %31 : vector<16x64xf32> to vector<16x64xbf16>
    %c0_28 = arith.constant 0 : index
    %c1_29 = arith.constant 1 : index
    %33 = vector.load %arg6[%c0_28, %c1_29] : memref<16x66xbf16, #tpu.memory_space<vmem>>, vector<16x64xbf16>
    tpu.vector_store %arg6[%c0_28, %c1_29], %32 {strides = array<i32>} : memref<16x66xbf16, #tpu.memory_space<vmem>>, vector<16x64xbf16>,
    %c0_30 = arith.constant 0 : index
    %c0_31 = arith.constant 0 : index
    %c0_32 = arith.constant 0 : index
    %34 = vector.load %arg3[%c0_30, %c0_31, %c0_32] : memref<3x16x16xbf16, #tpu.memory_space<vmem>>, vector<1x16x16xbf16>
    %35 = vector.shape_cast %34 : vector<1x16x16xbf16> to vector<16x16xbf16>
    %c0_33 = arith.constant 0 : index
    %c0_34 = arith.constant 0 : index
    %36 = vector.load %arg6[%c0_33, %c0_34] : memref<16x66xbf16, #tpu.memory_space<vmem>>, vector<16x64xbf16>
    %cst_35 = arith.constant dense<0.000000e+00> : vector<16x64xf32>
    %37 = tpu.matmul %35, %36, %cst_35 {dimension_numbers = #tpu.dot_dimension_numbers<[1], [0], [0], [1], [0, 0, 1, 1], [], []>} : vector<16x16xbf16>, vector<16x64xbf16>, vector<16x64xf32> -> vector<16x64xf32>
    %c1_36 = arith.constant 1 : index
    %c0_37 = arith.constant 0 : index
    %c0_38 = arith.constant 0 : index
    %38 = vector.load %arg3[%c1_36, %c0_37, %c0_38] : memref<3x16x16xbf16, #tpu.memory_space<vmem>>, vector<1x16x16xbf16>
    %39 = vector.shape_cast %38 : vector<1x16x16xbf16> to vector<16x16xbf16>
    %c0_39 = arith.constant 0 : index
    %c1_40 = arith.constant 1 : index
    %40 = vector.load %arg6[%c0_39, %c1_40] : memref<16x66xbf16, #tpu.memory_space<vmem>>, vector<16x64xbf16>
    %cst_41 = arith.constant dense<0.000000e+00> : vector<16x64xf32>
    %41 = tpu.matmul %39, %40, %cst_41 {dimension_numbers = #tpu.dot_dimension_numbers<[1], [0], [0], [1], [0, 0, 1, 1], [], []>} : vector<16x16xbf16>, vector<16x64xbf16>, vector<16x64xf32> -> vector<16x64xf32>
    %42 = arith.addf %37, %41 : vector<16x64xf32>
    %c2_42 = arith.constant 2 : index
    %c0_43 = arith.constant 0 : index
    %c0_44 = arith.constant 0 : index
    %43 = vector.load %arg3[%c2_42, %c0_43, %c0_44] : memref<3x16x16xbf16, #tpu.memory_space<vmem>>, vector<1x16x16xbf16>
    %44 = vector.shape_cast %43 : vector<1x16x16xbf16> to vector<16x16xbf16>
    %c0_45 = arith.constant 0 : index
    %c2_46 = arith.constant 2 : index
    %45 = vector.load %arg6[%c0_45, %c2_46] : memref<16x66xbf16, #tpu.memory_space<vmem>>, vector<16x64xbf16>
    %cst_47 = arith.constant dense<0.000000e+00> : vector<16x64xf32>
    %46 = tpu.matmul %44, %45, %cst_47 {dimension_numbers = #tpu.dot_dimension_numbers<[1], [0], [0], [1], [0, 0, 1, 1], [], []>} : vector<16x16xbf16>, vector<16x64xbf16>, vector<16x64xf32> -> vector<16x64xf32>
    %47 = arith.addf %42, %46 : vector<16x64xf32>
    %c1_48 = arith.constant 1 : index
    %c0_49 = arith.constant 0 : index
    %c0_50 = arith.constant 0 : index
    %48 = vector.load %arg4[%c1_48, %c0_49, %c0_50] : memref<2x16x1xf32, #tpu.memory_space<vmem>>, vector<1x16x1xf32>
    %49 = vector.shape_cast %48 : vector<1x16x1xf32> to vector<16x1xf32>
    %50 = vector.broadcast %49 : vector<16x1xf32> to vector<16x64xf32>
    %51 = arith.addf %47, %50 : vector<16x64xf32>
    %52 = arith.addf %5, %51 : vector<16x64xf32>
    %c0_51 = arith.constant 0 : index
    %c0_52 = arith.constant 0 : index
    %c0_53 = arith.constant 0 : index
    %53 = vector.load %arg5[%c0_51, %c0_52, %c0_53] : memref<1x16x64xf32, #tpu.memory_space<vmem>>, vector<1x16x64xf32>
    %54 = vector.shape_cast %53 : vector<1x16x64xf32> to vector<16x64xf32>
    %55 = vector.shape_cast %52 : vector<16x64xf32> to vector<1x16x64xf32>
    tpu.vector_store %arg5[%c0_51, %c0_52, %c0_53], %55 {strides = array<i32>} : memref<1x16x64xf32, #tpu.memory_space<vmem>>, vector<1x16x64xf32>,
    return
  }
  func.func @transform_0(%arg0: i32) -> (i32, i32, i32) {
    %c0_i32 = arith.constant 0 : i32
    %c0_i32_0 = arith.constant 0 : i32
    %c0_i32_1 = arith.constant 0 : i32
    return %arg0, %c0_i32, %c0_i32_0 : i32, i32, i32
  }
  func.func @transform_1(%arg0: i32) -> (i32, i32, i32) {
    %c0_i32 = arith.constant 0 : i32
    %c0_i32_0 = arith.constant 0 : i32
    %c0_i32_1 = arith.constant 0 : i32
    %c0_i32_2 = arith.constant 0 : i32
    return %c0_i32, %c0_i32_0, %c0_i32_1 : i32, i32, i32
  }
  func.func @transform_2(%arg0: i32) -> (i32, i32, i32) {
    %c0_i32 = arith.constant 0 : i32
    %c0_i32_0 = arith.constant 0 : i32
    %c0_i32_1 = arith.constant 0 : i32
    %c0_i32_2 = arith.constant 0 : i32
    return %c0_i32, %c0_i32_0, %c0_i32_1 : i32, i32, i32
  }
  func.func @transform_3(%arg0: i32) -> (i32, i32, i32) {
    %c0_i32 = arith.constant 0 : i32
    %c0_i32_0 = arith.constant 0 : i32
    %c0_i32_1 = arith.constant 0 : i32
    %c0_i32_2 = arith.constant 0 : i32
    return %c0_i32, %c0_i32_0, %c0_i32_1 : i32, i32, i32
  }
  func.func @transform_4(%arg0: i32) -> (i32, i32, i32) {
    %c0_i32 = arith.constant 0 : i32
    %c0_i32_0 = arith.constant 0 : i32
    %c0_i32_1 = arith.constant 0 : i32
    return %arg0, %c0_i32, %c0_i32_0 : i32, i32, i32
  }
}

</mosaic_0001>

<llo_original>
// kernel: tpu_custom_call.1
$region0: #{tpu_custom_call.1}
  #allocation0 [shape = 'u32[]', space=smem, size = 0x4, offset = 0x4, fixed_abs, tag = 'smem constant byte address 0x4 - core index']
  #allocation1 [shape = 'u32[144,128]{1,0:T(1,128)}', space=vmem, size = 0x12000, scoped, tag = 'internal scratch']
  #allocation2 [shape = 'bf16[16,66]{1,0:T(16,128)(2,1)}', space=vmem, size = 0x1000, scoped, tag = 'scratch operand']
  %s0 = inlined_call_operand.vmem [shape: f32[2,16,64], index: 0, kind: input, shape index: {}]
  %s1 = inlined_call_operand.hbm [shape: bf16[3,16,16], index: 1, kind: input, shape index: {}]
  %s2 = inlined_call_operand.hbm [shape: bf16[3,16,16], index: 2, kind: input, shape index: {}]
  %s3 = inlined_call_operand.vmem [shape: f32[2,16,1], index: 3, kind: input, shape index: {}]
  %s4 = inlined_call_operand.hbm [shape: f32[2,16,64], index: 4, kind: output, shape index: {}]
  %s5 = sld [smem:[#allocation0]]
  $region57: #{tpu_custom_call.1} parent=0
    _
  %s7 = ssub.s32 1, %s5
  %s8 = scalar_select 0, %s7, %s5
  $region1: #{tpu_custom_call.1} parent=0
    #allocation3 [shape = 'u8[12288]{0}', space=vmem, size = 0x3000, scoped, tag = 'input window, operand 1, single buffered']
    #allocation4 [shape = 's32[2]{0}', space=sflag, size = 0x8, scoped, tag = 'scoped memory for tpu_custom_call.1']
    #allocation5 [shape = 's32[2]{0}', space=sflag, size = 0x8, scoped, tag = 'scoped memory for tpu_custom_call.1']
    #allocation6 [shape = 'u8[12288]{0}', space=vmem, size = 0x3000, scoped, tag = 'input window, operand 2, single buffered']
    #allocation7 [shape = 's32[1]{0}', space=sflag, size = 0x4, scoped, tag = 'scoped memory for tpu_custom_call.1']
    #allocation8 [shape = 'u8[16384]{0}', space=vmem, size = 0x4000, scoped, tag = 'output window, operand 0']
    %9 = vsyncpa [#allocation4], 0
    %10 = vsyncpa [#allocation7], 0
    %11 = vsyncpa [#allocation5], 0
    %s12 = scalar_lea.sflag [#allocation5], 1
    %13 = vsyncpa %s12, 0
    loop: start=0, step=1, limit=4
    $region2: #{tpu_custom_call.1} parent=1 // loop_pre_header
      _
    $region3: #{tpu_custom_call.1} parent=1 // loop_header
      %s15 = sphi 0, %s19
      %p16 = scmp.ge.s32.totalorder %s15, 4
      %s25 = sphi 0, %s27
      %s28 = sphi 0, %s25
      %s29 = sphi 0, %s28
      %s45 = sphi 0, %s29
      %s49 = sphi 0, %s49
      %s51 = sphi 0, %s49
      %s52 = sphi 0, %s51
      %s66 = sphi 0, %s52
      %s70 = sphi 0, %s70
      %s72 = sphi 0, %s70
      %s73 = sphi 0, %s72
      %s87 = sphi 0, %s73
      %s91 = sphi 0, %s91
      %s93 = sphi 0, %s91
      %s94 = sphi 0, %s93
      %s108 = sphi 0, %s94
      %s114 = sphi 0, %s116
      %s117 = sphi 0, %s114
      %s118 = sphi 0, %s117
      %s134 = sphi 0, %s118
    $region4: #{tpu_custom_call.1} parent=1 // loop_header_branch
      %18 = sbr.rel (%p16) target = $region8
    $region5: #{tpu_custom_call.1} parent=1 // loop_body
      %s20 = ssub.s32 %s15, 1
      %s21 = ssub.s32 %s15, 2
      %s22 = sadd.s32 %s15, 1
      %s23 = ssub.s32 %s15, %s22
      %p24 = scmp.eq.s32.totalorder %s23, 0
      %s26 = sadd.s32 %s25, 1
      %s27 = scalar_select %p24, %s25, %s26
      %p30 = pneg %p24
      %p31 = scmp.eq.s32.totalorder %s15, 1
      %p32 = por %p30, %p31
      %p33 = scmp.ne.s32.totalorder %s25, %s28
      %p34 = scmp.eq.s32.totalorder %s15, 0
      %p35 = por %p33, %p34
      %p36 = scmp.ne.s32.totalorder %s25, %s28
      %p37 = scmp.eq.s32.totalorder %s20, 1
      %p38 = por %p36, %p37
      %p39 = scmp.ne.s32.totalorder %s28, %s29
      %p40 = scmp.eq.s32.totalorder %s20, 0
      %p41 = por %p39, %p40
      %p42 = scmp.ne.s32.totalorder %s28, %s29
      %p43 = scmp.eq.s32.totalorder %s21, 1
      %p44 = por %p42, %p43
      %p46 = scmp.ne.s32.totalorder %s29, %s45
      %p47 = scmp.eq.s32.totalorder %s21, 0
      %p48 = por %p46, %p47
      %s50 = sadd.s32 %s49, 1
      %p53 = scmp.eq.s32.totalorder %s15, 1
      %p54 = scmp.ne.s32.totalorder %s49, %s51
      %p55 = scmp.eq.s32.totalorder %s15, 0
      %p56 = por %p54, %p55
      %p57 = scmp.ne.s32.totalorder %s49, %s51
      %p58 = scmp.eq.s32.totalorder %s20, 1
      %p59 = por %p57, %p58
      %p60 = scmp.ne.s32.totalorder %s51, %s52
      %p61 = scmp.eq.s32.totalorder %s20, 0
      %p62 = por %p60, %p61
      %p63 = scmp.ne.s32.totalorder %s51, %s52
      %p64 = scmp.eq.s32.totalorder %s21, 1
      %p65 = por %p63, %p64
      %p67 = scmp.ne.s32.totalorder %s52, %s66
      %p68 = scmp.eq.s32.totalorder %s21, 0
      %p69 = por %p67, %p68
      %s71 = sadd.s32 %s70, 1
      %p74 = scmp.eq.s32.totalorder %s15, 1
      %p75 = scmp.ne.s32.totalorder %s70, %s72
      %p76 = scmp.eq.s32.totalorder %s15, 0
      %p77 = por %p75, %p76
      %p78 = scmp.ne.s32.totalorder %s70, %s72
      %p79 = scmp.eq.s32.totalorder %s20, 1
      %p80 = por %p78, %p79
      %p81 = scmp.ne.s32.totalorder %s72, %s73
      %p82 = scmp.eq.s32.totalorder %s20, 0
      %p83 = por %p81, %p82
      %p84 = scmp.ne.s32.totalorder %s72, %s73
      %p85 = scmp.eq.s32.totalorder %s21, 1
      %p86 = por %p84, %p85
      %p88 = scmp.ne.s32.totalorder %s73, %s87
      %p89 = scmp.eq.s32.totalorder %s21, 0
      %p90 = por %p88, %p89
      %s92 = sadd.s32 %s91, 1
      %p95 = scmp.eq.s32.totalorder %s15, 1
      %p96 = scmp.ne.s32.totalorder %s91, %s93
      %p97 = scmp.eq.s32.totalorder %s15, 0
      %p98 = por %p96, %p97
      %p99 = scmp.ne.s32.totalorder %s91, %s93
      %p100 = scmp.eq.s32.totalorder %s20, 1
      %p101 = por %p99, %p100
      %p102 = scmp.ne.s32.totalorder %s93, %s94
      %p103 = scmp.eq.s32.totalorder %s20, 0
      %p104 = por %p102, %p103
      %p105 = scmp.ne.s32.totalorder %s93, %s94
      %p106 = scmp.eq.s32.totalorder %s21, 1
      %p107 = por %p105, %p106
      %p109 = scmp.ne.s32.totalorder %s94, %s108
      %p110 = scmp.eq.s32.totalorder %s21, 0
      %p111 = por %p109, %p110
      %s112 = ssub.s32 %s15, %s22
      %p113 = scmp.eq.s32.totalorder %s112, 0
      %s115 = sadd.s32 %s114, 1
      %s116 = scalar_select %p113, %s114, %s115
      %p119 = pneg %p113
      %p120 = scmp.eq.s32.totalorder %s15, 1
      %p121 = por %p119, %p120
      %p122 = scmp.ne.s32.totalorder %s114, %s117
      %p123 = scmp.eq.s32.totalorder %s15, 0
      %p124 = por %p122, %p123
      %p125 = scmp.ne.s32.totalorder %s114, %s117
      %p126 = scmp.eq.s32.totalorder %s20, 1
      %p127 = por %p125, %p126
      %p128 = scmp.ne.s32.totalorder %s117, %s118
      %p129 = scmp.eq.s32.totalorder %s20, 0
      %p130 = por %p128, %p129
      %p131 = scmp.ne.s32.totalorder %s117, %s118
      %p132 = scmp.eq.s32.totalorder %s21, 1
      %p133 = por %p131, %p132
      %p135 = scmp.ne.s32.totalorder %s118, %s134
      %p136 = scmp.eq.s32.totalorder %s21, 0
      %p137 = por %p135, %p136
      %p138 = scmp.le.s32.totalorder 1, %s15
      %p139 = scmp.lt.s32.totalorder %s15, 3
      %p140 = pnand %p138, %p139
      %p141 = pneg %p140
      // Predicated region
      $region9: #{tpu_custom_call.1} parent=5 // pred_check
        _
      $region10: #{tpu_custom_call.1} parent=5 // pred_check_branch
        %143 = sbr.rel (%p140) target = $region12
      $region11: #{tpu_custom_call.1} parent=5 // pred_region
        %s144 = ssub.s32 %s15, 1
        // Predicated region
        $region13: #{tpu_custom_call.1} parent=11 // pred_check
          %p145 = pneg %p62
        $region14: #{tpu_custom_call.1} parent=11 // pred_check_branch
          %147 = sbr.rel (%p145) target = $region16
        $region15: #{tpu_custom_call.1} parent=11 // pred_region
          %s149 = ssub.s32 384, 384
          %150 = vsyncadd [#allocation4], %s149
          %s151 = sshll.u32 [#allocation3], 4
          %s152 = int_to_ptr.vmem [resolvable:$true] %s151
          %157 = dma.hbm_to_vmem [thread:$0]  %s1, 384, %s152, [#allocation4], 64, 64, 4
        $region16: #{tpu_custom_call.1} parent=11 // pred_fallthru
          _
        // Predicated region
        $region17: #{tpu_custom_call.1} parent=11 // pred_check
          %p158 = pneg %p83
        $region18: #{tpu_custom_call.1} parent=11 // pred_check_branch
          %160 = sbr.rel (%p158) target = $region20
        $region19: #{tpu_custom_call.1} parent=11 // pred_region
          %s162 = ssub.s32 384, 384
          %163 = vsyncadd [#allocation7], %s162
          %s164 = sshll.u32 [#allocation6], 4
          %s165 = int_to_ptr.vmem [resolvable:$true] %s164
          %170 = dma.hbm_to_vmem [thread:$0]  %s2, 384, %s165, [#allocation7], 64, 64, 4
        $region20: #{tpu_custom_call.1} parent=11 // pred_fallthru
          _
        // Predicated region
        $region21: #{tpu_custom_call.1} parent=11 // pred_check
          %p171 = pneg %p104
        $region22: #{tpu_custom_call.1} parent=11 // pred_check_branch
          %173 = sbr.rel (%p171) target = $region24
        $region23: #{tpu_custom_call.1} parent=11 // pred_region
          _
        $region24: #{tpu_custom_call.1} parent=11 // pred_fallthru
          _
      $region12: #{tpu_custom_call.1} parent=5 // pred_fallthru
        _
      %p174 = scmp.lt.s32.totalorder %s15, 2
      // Predicated region
      $region25: #{tpu_custom_call.1} parent=5 // pred_check
        %p175 = pneg %p174
      $region26: #{tpu_custom_call.1} parent=5 // pred_check_branch
        %177 = sbr.rel (%p175) target = $region28
      $region27: #{tpu_custom_call.1} parent=5 // pred_region
        // Predicated region
        $region29: #{tpu_custom_call.1} parent=27 // pred_check
          %p178 = pneg %p35
        $region30: #{tpu_custom_call.1} parent=27 // pred_check_branch
          %180 = sbr.rel (%p178) target = $region32
        $region31: #{tpu_custom_call.1} parent=27 // pred_region
          %p181 = scmp.lt.s32.totalorder %s15, 1
          %s182 = scalar_select %p181, %s15, 1
          %s183 = smul.addr %s182, 2
          %s184 = smul.addr %s183, 8
          %s185 = scalar_lea.vmem %s0, %s184
        $region32: #{tpu_custom_call.1} parent=27 // pred_fallthru
          _
      $region28: #{tpu_custom_call.1} parent=5 // pred_fallthru
        _
      %p186 = scmp.le.s32.totalorder 1, %s15
      %p187 = scmp.lt.s32.totalorder %s15, 3
      %p188 = pnand %p186, %p187
      %p189 = pneg %p188
      // Predicated region
      $region33: #{tpu_custom_call.1} parent=5 // pred_check
        _
      $region34: #{tpu_custom_call.1} parent=5 // pred_check_branch
        %191 = sbr.rel (%p188) target = $region36
      $region35: #{tpu_custom_call.1} parent=5 // pred_region
        %s192 = ssub.s32 %s15, 1
        // Predicated region
        $region37: #{tpu_custom_call.1} parent=35 // pred_check
          %p193 = pneg %p62
        $region38: #{tpu_custom_call.1} parent=35 // pred_check_branch
          %195 = sbr.rel (%p193) target = $region40
        $region39: #{tpu_custom_call.1} parent=35 // pred_region
          %196 = dma.done [#allocation4], 384
        $region40: #{tpu_custom_call.1} parent=35 // pred_fallthru
          _
        // Predicated region
        $region41: #{tpu_custom_call.1} parent=35 // pred_check
          %p197 = pneg %p83
        $region42: #{tpu_custom_call.1} parent=35 // pred_check_branch
          %199 = sbr.rel (%p197) target = $region44
        $region43: #{tpu_custom_call.1} parent=35 // pred_region
          %200 = dma.done [#allocation7], 384
        $region44: #{tpu_custom_call.1} parent=35 // pred_fallthru
          _
        %p201 = scmp.lt.s32.totalorder %s20, 1
        %s202 = scalar_select %p201, %s20, 1
        %s203 = smul.addr %s202, 2
        %s204 = smul.addr %s203, 8
        %s205 = scalar_lea.vmem %s0, %s204
        %p206 = pneg %p41
        %p207 = pneg %p38
        %p208 = pneg %p62
        %p209 = pneg %p59
        %p210 = pneg %p83
        %p211 = pneg %p80
        %p212 = pneg %p104
        %p213 = pneg %p101
        %p214 = pneg %p130
        %p215 = pneg %p127
        %s216 = sand.u32 %s117, 1
        %s217 = scalar_lea.sflag [#allocation5], %s216
        %s218 = sand.u32 %s117, 1
        %s219 = smul.addr %s218, 16
        %s220 = scalar_lea.vmem [#allocation8], %s219
        %p221 = scmp.lt.s32.totalorder %s20, 1
        %s222 = scalar_select %p221, %s20, 1
        %s223 = smul.addr %s222, 2
        %s224 = smul.addr %s223, 8
        %s225 = scalar_lea.vmem %s0, %s224
        %vm227 = vcmask 7168
        %228 = vst.msk [vmem:[#allocation2] sm:$0xff] %vm227, 0
        %vm229 = vcmask 540168
        %230 = vst.msk [vmem:[#allocation2] sm:$0xff] %vm229, 0
        %v231 = vld [vmem:[%s225] sm:$0xff]
        %v232 = vld [vmem:[%s225 + $0x8] sm:$0xff]
        %v233 = vpack.c.bf16 %v232, %v231
        %235 = vrot.lane.b32.xlu0 %v233, 1
        %v236 = vpop.permute.xlu0 %235
        %vm238 = vcmask 531464
        %239 = vst.msk [vmem:[#allocation2] sm:$0xff] %vm238, %v236
        %v240 = vld [vmem:[#allocation3] sm:$0xf]
        %v241 = vld [vmem:[#allocation3 + $0x4] sm:$0xf]
        %v242 = vld [vmem:[#allocation2] sm:$0xff]
        %s243 = scalar_lea.vmem [#allocation3], 8
        %v244 = vld [vmem:[%s243] sm:$0xf]
        %v245 = vld [vmem:[%s243 + $0x4] sm:$0xf]
        %v248 = vunpack.c.l.b16 %v244
        %v249 = vunpack.c.l.b16 %v245
        %v250 = vpack.c.b16 %v249, %v248
        %252 = vrot.lane.b32.xlu0 %v242, 127
        %v253 = vpop.permute.xlu0 %252
        %vm255 = vcmask 130048
        %v257 = vsel %vm255, %v250, 0
        %259 = vmatprep.subr.bf16.mxu0 0
        %260 = vmatpush1.bf16.msra.mxu0 %v253
        %261 = vmatprep.subr.bf16.mxu0 0
        %262 = vmatpush1.bf16.msra.mxu0 0
        %263 = vmatprep.subr.bf16.mxu0 0
        %264 = vmatpush1.bf16.msra.mxu0 0
        %265 = vmatprep.subr.bf16.mxu0 0
        %266 = vmatpush1.bf16.msra.mxu0 0
        %267 = vmatprep.subr.bf16.mxu0 0
        %268 = vmatpush1.bf16.msra.mxu0 0
        %269 = vmatprep.subr.bf16.mxu0 0
        %270 = vmatpush1.bf16.msra.mxu0 0
        %271 = vmatprep.subr.bf16.mxu0 0
        %272 = vmatpush1.bf16.msra.mxu0 0
        %273 = vmatprep.subr.bf16.mxu0 0
        %274 = vmatpush1.bf16.msra.mxu0 0
        %275 = vmatprep.subr.bf16.mxu0 0
        %276 = vmatpush1.bf16.msra.mxu0 0
        %277 = vmatprep.subr.bf16.mxu0 0
        %278 = vmatpush1.bf16.msra.mxu0 0
        %279 = vmatprep.subr.bf16.mxu0 0
        %280 = vmatpush1.bf16.msra.mxu0 0
        %281 = vmatprep.subr.bf16.mxu0 0
        %282 = vmatpush1.bf16.msra.mxu0 0
        %283 = vmatprep.subr.bf16.mxu0 0
        %284 = vmatpush1.bf16.msra.mxu0 0
        %285 = vmatprep.subr.bf16.mxu0 0
        %286 = vmatpush1.bf16.msra.mxu0 0
        %287 = vmatprep.subr.bf16.mxu0 0
        %288 = vmatpush1.bf16.msra.mxu0 0
        %289 = vmatprep.subr.bf16.mxu0 0
        %290 = vmatpush1.bf16.msra.mxu0 0
        %291 = vmatprep.mubr.bf16.mxu0 0
        %292 = vmatmul.mubr.bf16.gmra.mrb[0].mxu0 %v257
        %v293 = vpop.f32.mrb[0].mxu0
        %v294 = vadd.f32 0.0, %v293
        %v295 = vpop.f32.mrb[0].mxu0
        %v296 = vpop.f32.mrb[0].mxu0
        %v297 = vadd.f32 0.0, %v296
        %v298 = vpop.f32.mrb[0].mxu0
        %299 = vdwg.mxu0
        %v302 = vunpack.c.l.b16 %v240
        %v303 = vunpack.c.l.b16 %v241
        %v304 = vpack.c.b16 %v303, %v302
        %v306 = vsel %vm255, %v304, 0
        %308 = vmatprep.subr.bf16.mxu0 0
        %309 = vmatpush1.bf16.msra.mxu0 %v242
        %310 = vmatprep.subr.bf16.mxu0 0
        %311 = vmatpush1.bf16.msra.mxu0 0
        %312 = vmatprep.subr.bf16.mxu0 0
        %313 = vmatpush1.bf16.msra.mxu0 0
        %314 = vmatprep.subr.bf16.mxu0 0
        %315 = vmatpush1.bf16.msra.mxu0 0
        %316 = vmatprep.subr.bf16.mxu0 0
        %317 = vmatpush1.bf16.msra.mxu0 0
        %318 = vmatprep.subr.bf16.mxu0 0
        %319 = vmatpush1.bf16.msra.mxu0 0
        %320 = vmatprep.subr.bf16.mxu0 0
        %321 = vmatpush1.bf16.msra.mxu0 0
        %322 = vmatprep.subr.bf16.mxu0 0
        %323 = vmatpush1.bf16.msra.mxu0 0
        %324 = vmatprep.subr.bf16.mxu0 0
        %325 = vmatpush1.bf16.msra.mxu0 0
        %326 = vmatprep.subr.bf16.mxu0 0
        %327 = vmatpush1.bf16.msra.mxu0 0
        %328 = vmatprep.subr.bf16.mxu0 0
        %329 = vmatpush1.bf16.msra.mxu0 0
        %330 = vmatprep.subr.bf16.mxu0 0
        %331 = vmatpush1.bf16.msra.mxu0 0
        %332 = vmatprep.subr.bf16.mxu0 0
        %333 = vmatpush1.bf16.msra.mxu0 0
        %334 = vmatprep.subr.bf16.mxu0 0
        %335 = vmatpush1.bf16.msra.mxu0 0
        %336 = vmatprep.subr.bf16.mxu0 0
        %337 = vmatpush1.bf16.msra.mxu0 0
        %338 = vmatprep.subr.bf16.mxu0 0
        %339 = vmatpush1.bf16.msra.mxu0 0
        %340 = vmatprep.mubr.bf16.mxu0 0
        %341 = vmatmul.mubr.bf16.gmra.mrb[0].mxu0 %v306
        %v342 = vpop.f32.mrb[0].mxu0
        %v343 = vadd.f32 %v294, %v342
        %v344 = vpop.f32.mrb[0].mxu0
        %v345 = vpop.f32.mrb[0].mxu0
        %v346 = vadd.f32 %v297, %v345
        %v347 = vpop.f32.mrb[0].mxu0
        %348 = vdwg.mxu0
        %s349 = scalar_lea.vmem [#allocation3], 16
        %v350 = vld [vmem:[%s349] sm:$0xf]
        %v351 = vld [vmem:[%s349 + $0x4] sm:$0xf]
        %v354 = vunpack.c.l.b16 %v350
        %v355 = vunpack.c.l.b16 %v351
        %v356 = vpack.c.b16 %v355, %v354
        %357 = vrot.lane.b32.xlu0 %v242, 126
        %v358 = vpop.permute.xlu0 %357
        %v361 = vsel %vm255, %v356, 0
        %363 = vmatprep.subr.bf16.mxu0 0
        %364 = vmatpush1.bf16.msra.mxu0 %v358
        %365 = vmatprep.subr.bf16.mxu0 0
        %366 = vmatpush1.bf16.msra.mxu0 0
        %367 = vmatprep.subr.bf16.mxu0 0
        %368 = vmatpush1.bf16.msra.mxu0 0
        %369 = vmatprep.subr.bf16.mxu0 0
        %370 = vmatpush1.bf16.msra.mxu0 0
        %371 = vmatprep.subr.bf16.mxu0 0
        %372 = vmatpush1.bf16.msra.mxu0 0
        %373 = vmatprep.subr.bf16.mxu0 0
        %374 = vmatpush1.bf16.msra.mxu0 0
        %375 = vmatprep.subr.bf16.mxu0 0
        %376 = vmatpush1.bf16.msra.mxu0 0
        %377 = vmatprep.subr.bf16.mxu0 0
        %378 = vmatpush1.bf16.msra.mxu0 0
        %379 = vmatprep.subr.bf16.mxu0 0
        %380 = vmatpush1.bf16.msra.mxu0 0
        %381 = vmatprep.subr.bf16.mxu0 0
        %382 = vmatpush1.bf16.msra.mxu0 0
        %383 = vmatprep.subr.bf16.mxu0 0
        %384 = vmatpush1.bf16.msra.mxu0 0
        %385 = vmatprep.subr.bf16.mxu0 0
        %386 = vmatpush1.bf16.msra.mxu0 0
        %387 = vmatprep.subr.bf16.mxu0 0
        %388 = vmatpush1.bf16.msra.mxu0 0
        %389 = vmatprep.subr.bf16.mxu0 0
        %390 = vmatpush1.bf16.msra.mxu0 0
        %391 = vmatprep.subr.bf16.mxu0 0
        %392 = vmatpush1.bf16.msra.mxu0 0
        %393 = vmatprep.subr.bf16.mxu0 0
        %394 = vmatpush1.bf16.msra.mxu0 0
        %395 = vmatprep.mubr.bf16.mxu0 0
        %396 = vmatmul.mubr.bf16.gmra.mrb[0].mxu0 %v361
        %v397 = vpop.f32.mrb[0].mxu0
        %v398 = vadd.f32 0.0, %v397
        %v399 = vpop.f32.mrb[0].mxu0
        %v400 = vpop.f32.mrb[0].mxu0
        %v401 = vadd.f32 0.0, %v400
        %v402 = vpop.f32.mrb[0].mxu0
        %403 = vdwg.mxu0
        %v404 = vadd.f32 %v343, %v398
        %v405 = vadd.f32 %v346, %v401
        %v406 = vld [vmem:[%s3] sm:$0xff]
        %v407 = vld [vmem:[%s3 + $0x8] sm:$0xff]
        %409 = vset.pattern.permute.xlu0 0
        %410 = vperm.xlu0 %409, %v406
        %v411 = vpop.permute.xlu0 %410
        %414 = vset.pattern.permute.xlu0 0
        %415 = vperm.xlu0 %414, %v407
        %v416 = vpop.permute.xlu0 %415
        %v418 = vadd.f32 %v404, %v411
        %v419 = vadd.f32 %v405, %v416
        %v420 = vxor.u32 %v418, 2147483648
        %v421 = vxor.u32 %v419, 2147483648
        %v422 = vmul.f32 %v420, 1.442695
        %v423 = vpow.pop %v422
        %v424 = vmul.f32 %v421, 1.442695
        %v425 = vpow.pop %v424
        %v426 = vadd.f32 %v423, 1.0
        %v427 = vadd.f32 %v425, 1.0
        %v428 = vrcp.pop %v426
        %v429 = vmul.f32 1.0, %v428
        %v430 = vrcp.pop %v427
        %v431 = vmul.f32 1.0, %v430
        %v432 = vmul.f32 %v418, %v429
        %v433 = vmul.f32 %v419, %v431
        %v434 = vpack.c.bf16 %v433, %v432
        %436 = vrot.lane.b32.xlu0 %v434, 1
        %v437 = vpop.permute.xlu0 %436
        %439 = vst.msk [vmem:[#allocation2] sm:$0xff] %vm238, %v437
        %v440 = vld [vmem:[#allocation6] sm:$0xf]
        %v441 = vld [vmem:[#allocation6 + $0x4] sm:$0xf]
        %v442 = vld [vmem:[#allocation2] sm:$0xff]
        %s443 = scalar_lea.vmem [#allocation6], 8
        %v444 = vld [vmem:[%s443] sm:$0xf]
        %v445 = vld [vmem:[%s443 + $0x4] sm:$0xf]
        %v448 = vunpack.c.l.b16 %v444
        %v449 = vunpack.c.l.b16 %v445
        %v450 = vpack.c.b16 %v449, %v448
        %452 = vrot.lane.b32.xlu0 %v442, 127
        %v453 = vpop.permute.xlu0 %452
        %v456 = vsel %vm255, %v450, 0
        %458 = vmatprep.subr.bf16.mxu0 0
        %459 = vmatpush1.bf16.msra.mxu0 %v453
        %460 = vmatprep.subr.bf16.mxu0 0
        %461 = vmatpush1.bf16.msra.mxu0 0
        %462 = vmatprep.subr.bf16.mxu0 0
        %463 = vmatpush1.bf16.msra.mxu0 0
        %464 = vmatprep.subr.bf16.mxu0 0
        %465 = vmatpush1.bf16.msra.mxu0 0
        %466 = vmatprep.subr.bf16.mxu0 0
        %467 = vmatpush1.bf16.msra.mxu0 0
        %468 = vmatprep.subr.bf16.mxu0 0
        %469 = vmatpush1.bf16.msra.mxu0 0
        %470 = vmatprep.subr.bf16.mxu0 0
        %471 = vmatpush1.bf16.msra.mxu0 0
        %472 = vmatprep.subr.bf16.mxu0 0
        %473 = vmatpush1.bf16.msra.mxu0 0
        %474 = vmatprep.subr.bf16.mxu0 0
        %475 = vmatpush1.bf16.msra.mxu0 0
        %476 = vmatprep.subr.bf16.mxu0 0
        %477 = vmatpush1.bf16.msra.mxu0 0
        %478 = vmatprep.subr.bf16.mxu0 0
        %479 = vmatpush1.bf16.msra.mxu0 0
        %480 = vmatprep.subr.bf16.mxu0 0
        %481 = vmatpush1.bf16.msra.mxu0 0
        %482 = vmatprep.subr.bf16.mxu0 0
        %483 = vmatpush1.bf16.msra.mxu0 0
        %484 = vmatprep.subr.bf16.mxu0 0
        %485 = vmatpush1.bf16.msra.mxu0 0
        %486 = vmatprep.subr.bf16.mxu0 0
        %487 = vmatpush1.bf16.msra.mxu0 0
        %488 = vmatprep.subr.bf16.mxu0 0
        %489 = vmatpush1.bf16.msra.mxu0 0
        %490 = vmatprep.mubr.bf16.mxu0 0
        %491 = vmatmul.mubr.bf16.gmra.mrb[0].mxu0 %v456
        %v492 = vpop.f32.mrb[0].mxu0
        %v493 = vadd.f32 0.0, %v492
        %v494 = vpop.f32.mrb[0].mxu0
        %v495 = vpop.f32.mrb[0].mxu0
        %v496 = vadd.f32 0.0, %v495
        %v497 = vpop.f32.mrb[0].mxu0
        %498 = vdwg.mxu0
        %v501 = vunpack.c.l.b16 %v440
        %v502 = vunpack.c.l.b16 %v441
        %v503 = vpack.c.b16 %v502, %v501
        %v505 = vsel %vm255, %v503, 0
        %507 = vmatprep.subr.bf16.mxu0 0
        %508 = vmatpush1.bf16.msra.mxu0 %v442
        %509 = vmatprep.subr.bf16.mxu0 0
        %510 = vmatpush1.bf16.msra.mxu0 0
        %511 = vmatprep.subr.bf16.mxu0 0
        %512 = vmatpush1.bf16.msra.mxu0 0
        %513 = vmatprep.subr.bf16.mxu0 0
        %514 = vmatpush1.bf16.msra.mxu0 0
        %515 = vmatprep.subr.bf16.mxu0 0
        %516 = vmatpush1.bf16.msra.mxu0 0
        %517 = vmatprep.subr.bf16.mxu0 0
        %518 = vmatpush1.bf16.msra.mxu0 0
        %519 = vmatprep.subr.bf16.mxu0 0
        %520 = vmatpush1.bf16.msra.mxu0 0
        %521 = vmatprep.subr.bf16.mxu0 0
        %522 = vmatpush1.bf16.msra.mxu0 0
        %523 = vmatprep.subr.bf16.mxu0 0
        %524 = vmatpush1.bf16.msra.mxu0 0
        %525 = vmatprep.subr.bf16.mxu0 0
        %526 = vmatpush1.bf16.msra.mxu0 0
        %527 = vmatprep.subr.bf16.mxu0 0
        %528 = vmatpush1.bf16.msra.mxu0 0
        %529 = vmatprep.subr.bf16.mxu0 0
        %530 = vmatpush1.bf16.msra.mxu0 0
        %531 = vmatprep.subr.bf16.mxu0 0
        %532 = vmatpush1.bf16.msra.mxu0 0
        %533 = vmatprep.subr.bf16.mxu0 0
        %534 = vmatpush1.bf16.msra.mxu0 0
        %535 = vmatprep.subr.bf16.mxu0 0
        %536 = vmatpush1.bf16.msra.mxu0 0
        %537 = vmatprep.subr.bf16.mxu0 0
        %538 = vmatpush1.bf16.msra.mxu0 0
        %539 = vmatprep.mubr.bf16.mxu0 0
        %540 = vmatmul.mubr.bf16.gmra.mrb[0].mxu0 %v505
        %v541 = vpop.f32.mrb[0].mxu0
        %v542 = vadd.f32 %v493, %v541
        %v543 = vpop.f32.mrb[0].mxu0
        %v544 = vpop.f32.mrb[0].mxu0
        %v545 = vadd.f32 %v496, %v544
        %v546 = vpop.f32.mrb[0].mxu0
        %547 = vdwg.mxu0
        %s548 = scalar_lea.vmem [#allocation6], 16
        %v549 = vld [vmem:[%s548] sm:$0xf]
        %v550 = vld [vmem:[%s548 + $0x4] sm:$0xf]
        %v553 = vunpack.c.l.b16 %v549
        %v554 = vunpack.c.l.b16 %v550
        %v555 = vpack.c.b16 %v554, %v553
        %556 = vrot.lane.b32.xlu0 %v442, 126
        %v557 = vpop.permute.xlu0 %556
        %v560 = vsel %vm255, %v555, 0
        %562 = vmatprep.subr.bf16.mxu0 0
        %563 = vmatpush1.bf16.msra.mxu0 %v557
        %564 = vmatprep.subr.bf16.mxu0 0
        %565 = vmatpush1.bf16.msra.mxu0 0
        %566 = vmatprep.subr.bf16.mxu0 0
        %567 = vmatpush1.bf16.msra.mxu0 0
        %568 = vmatprep.subr.bf16.mxu0 0
        %569 = vmatpush1.bf16.msra.mxu0 0
        %570 = vmatprep.subr.bf16.mxu0 0
        %571 = vmatpush1.bf16.msra.mxu0 0
        %572 = vmatprep.subr.bf16.mxu0 0
        %573 = vmatpush1.bf16.msra.mxu0 0
        %574 = vmatprep.subr.bf16.mxu0 0
        %575 = vmatpush1.bf16.msra.mxu0 0
        %576 = vmatprep.subr.bf16.mxu0 0
        %577 = vmatpush1.bf16.msra.mxu0 0
        %578 = vmatprep.subr.bf16.mxu0 0
        %579 = vmatpush1.bf16.msra.mxu0 0
        %580 = vmatprep.subr.bf16.mxu0 0
        %581 = vmatpush1.bf16.msra.mxu0 0
        %582 = vmatprep.subr.bf16.mxu0 0
        %583 = vmatpush1.bf16.msra.mxu0 0
        %584 = vmatprep.subr.bf16.mxu0 0
        %585 = vmatpush1.bf16.msra.mxu0 0
        %586 = vmatprep.subr.bf16.mxu0 0
        %587 = vmatpush1.bf16.msra.mxu0 0
        %588 = vmatprep.subr.bf16.mxu0 0
        %589 = vmatpush1.bf16.msra.mxu0 0
        %590 = vmatprep.subr.bf16.mxu0 0
        %591 = vmatpush1.bf16.msra.mxu0 0
        %592 = vmatprep.subr.bf16.mxu0 0
        %593 = vmatpush1.bf16.msra.mxu0 0
        %594 = vmatprep.mubr.bf16.mxu0 0
        %595 = vmatmul.mubr.bf16.gmra.mrb[0].mxu0 %v560
        %v596 = vpop.f32.mrb[0].mxu0
        %v597 = vadd.f32 0.0, %v596
        %v598 = vpop.f32.mrb[0].mxu0
        %v599 = vpop.f32.mrb[0].mxu0
        %v600 = vadd.f32 0.0, %v599
        %v601 = vpop.f32.mrb[0].mxu0
        %602 = vdwg.mxu0
        %v603 = vadd.f32 %v542, %v597
        %v604 = vadd.f32 %v545, %v600
        %s605 = scalar_lea.vmem %s3, 16
        %v606 = vld [vmem:[%s605] sm:$0xff]
        %v607 = vld [vmem:[%s605 + $0x8] sm:$0xff]
        %609 = vset.pattern.permute.xlu0 0
        %610 = vperm.xlu0 %609, %v606
        %v611 = vpop.permute.xlu0 %610
        %614 = vset.pattern.permute.xlu0 0
        %615 = vperm.xlu0 %614, %v607
        %v616 = vpop.permute.xlu0 %615
        %v618 = vadd.f32 %v603, %v611
        %v619 = vadd.f32 %v604, %v616
        %v620 = vadd.f32 %v231, %v618
        %v621 = vadd.f32 %v232, %v619
        %vm622 = vcmask 523264
        %623 = vst.msk [vmem:[%s220] sm:$0xff] %vm622, %v620
        %624 = vst.msk [vmem:[%s220 + $0x8] sm:$0xff] %vm622, %v621
        %s625 = sand.u32 %s117, 1
        %s626 = scalar_lea.sflag [#allocation5], %s625
        %s627 = sand.u32 %s117, 1
        %s628 = smul.addr %s627, 16
        %s629 = scalar_lea.vmem [#allocation8], %s628
        // Predicated region
        $region45: #{tpu_custom_call.1} parent=35 // pred_check
          %p630 = pneg %p127
        $region46: #{tpu_custom_call.1} parent=35 // pred_check_branch
          %632 = sbr.rel (%p630) target = $region48
        $region47: #{tpu_custom_call.1} parent=35 // pred_region
          %s634 = ssub.s32 256, 256
          %635 = vsyncadd %s626, %s634
          %s636 = smul.addr %s20, 2
          %s637 = smul.addr %s636, 128
          %s638 = scalar_lea.hbm %s4, %s637
          %s639 = sshll.u32 %s629, 4
          %s640 = int_to_ptr.vmem [resolvable:$true] %s639
          %645 = dma.vmem_to_hbm [thread:$0]  %s640, 256, %s638, %s626, 128, 128, 8
        $region48: #{tpu_custom_call.1} parent=35 // pred_fallthru
          _
      $region36: #{tpu_custom_call.1} parent=5 // pred_fallthru
        _
      %p646 = scmp.le.s32.totalorder 2, %s15
      // Predicated region
      $region49: #{tpu_custom_call.1} parent=5 // pred_check
        %p647 = pneg %p646
      $region50: #{tpu_custom_call.1} parent=5 // pred_check_branch
        %649 = sbr.rel (%p647) target = $region52
      $region51: #{tpu_custom_call.1} parent=5 // pred_region
        %s650 = ssub.s32 %s15, 2
        // Predicated region
        $region53: #{tpu_custom_call.1} parent=51 // pred_check
          %p651 = pneg %p133
        $region54: #{tpu_custom_call.1} parent=51 // pred_check_branch
          %653 = sbr.rel (%p651) target = $region56
        $region55: #{tpu_custom_call.1} parent=51 // pred_region
          %s654 = sand.u32 %s118, 1
          %s655 = scalar_lea.sflag [#allocation5], %s654
          %s656 = sand.u32 %s118, 1
          %s657 = smul.addr %s656, 16
          %s658 = scalar_lea.vmem [#allocation8], %s657
          %659 = dma.done %s655, 256
        $region56: #{tpu_custom_call.1} parent=51 // pred_fallthru
          _
      $region52: #{tpu_custom_call.1} parent=5 // pred_fallthru
        _
    $region6: #{tpu_custom_call.1} parent=1 // loop_footer
      %s19 = sadd.s32 1, %s15
    $region7: #{tpu_custom_call.1} parent=1 // loop_footer_branch
      %14 = sbr.rel target = $region3
    $region8: #{tpu_custom_call.1} parent=1 // loop_exit
      _
    %660 = vsyncpa [#allocation4], 1
    %s661 = scalar_lea.sflag [#allocation4], 1
    %662 = vsyncpa %s661, 1
    %663 = vsyncpa [#allocation7], 1
    %664 = vsyncpa [#allocation5], 1
    %s665 = scalar_lea.sflag [#allocation5], 1
    %666 = vsyncpa %s665, 1

</llo_original>
